<compile_context>
chip_gen: v6e
topology: v6e:2x2x1
jax: 0.10.0
libtpu: 0.0.40
codegen_flags: <defaults>
</compile_context>

<pallas_src>
import functools

import jax
import jax.numpy as jnp
from jax.experimental import pallas as pl
from jax.experimental.pallas import tpu as pltpu

LANE = 128      # vreg / MXU lane width (VMEM layout granularity, last dim)
SUBLANE = 8     # f32 sublane granularity (second-to-last dim)


def _round_up(x, m):
    return ((x + m - 1) // m) * m


def encoder_kernel(x_ref, w1_ref, b1_ref, w2_ref, b2_ref, o_ref):
    # map1: MXU matmul with f32 accumulation; bias + ReLU fused on the f32
    # accumulator (VPU), single pass over the tile.
    h = jnp.dot(x_ref[...], w1_ref[...], preferred_element_type=jnp.float32)
    h = jnp.maximum(h + b1_ref[...], 0.0)
    # Only cast activations if map2's weights are lower precision
    # (avoids a redundant vreg->vreg pass on the all-f32 path).
    if h.dtype != w2_ref.dtype:
        h = h.astype(w2_ref.dtype)
    # map2 + fused bias epilogue.
    y = jnp.dot(h, w2_ref[...], preferred_element_type=jnp.float32)
    o_ref[...] = (y + b2_ref[...]).astype(o_ref.dtype)


def _vmem_budget_bytes():
    """Generation-aware VMEM budget (~0.75x physical capacity).
    Falls back to a conservative 48 MiB (v7x has the smallest VMEM: 64 MiB)."""
    try:
        info = pltpu.get_tpu_info()
        cap = int(getattr(info, "vmem_capacity_bytes", 0))
        if cap > 0:
            return int(cap * 0.75)
    except Exception:
        pass
    return 48 * 1024 * 1024


def _pick_tile_b(batch, in_size, hid, out_size, dtype_bytes, budget_bytes,
                 max_tile=2048):
    """Largest batch tile (multiple of 8, <= max_tile) whose double-buffered
    activation tiles + resident weights fit in the VMEM budget.  The VMEM
    footprint uses feature dims rounded up to the (8, 128) layout even though
    the HBM arrays stay unpadded."""
    in_l = _round_up(in_size, LANE)
    hid_l = _round_up(hid, LANE)
    out_l = _round_up(out_size, LANE)
    # Constant-index weights/biases are still double-buffered by the default
    # pipeline; for this module they are only a few KiB, so that is free.
    # TODO(synk): for very large hidden/output sizes, add K/N feature tiling
    # and pipeline_mode=pl.Buffered(1) on the weights instead of shrinking
    # tile_b all the way down.
    weights = (in_l * hid_l + hid_l * out_l + 2 * (hid_l + out_l)) * dtype_bytes * 2
    tile = min(_round_up(batch, SUBLANE), max_tile)
    while tile > SUBLANE:
        acts = tile * (in_l + out_l) * dtype_bytes * 2   # x / out tiles, 2x buffered
        hidden = tile * hid_l * 4                        # f32 intermediate
        if weights + acts + hidden <= budget_bytes:
            break
        tile -= SUBLANE
    return max(tile, SUBLANE)


@functools.partial(jax.jit, static_argnames=("tile_b",))
def encoder_forward(x, w1, b1, w2, b2, *, tile_b=None):
    """x: (B, input_size); w1: (input_size, hidden); b1: (hidden,);
       w2: (hidden, output); b2: (output,).  Returns (B, output)."""
    B, in_size = x.shape
    hid = w1.shape[1]
    out_size = w2.shape[1]
    b1 = b1.reshape(1, -1)
    b2 = b2.reshape(1, -1)

    dtype_bytes = jnp.dtype(x.dtype).itemsize
    budget = _vmem_budget_bytes()

    if tile_b is None:
        tile_b = _pick_tile_b(B, in_size, hid, out_size, dtype_bytes,
                              int(budget * 0.6))
    # Never exceed the (rounded-up) batch; keep a multiple of the sublane width.
    tile_b = max(SUBLANE, _round_up(min(int(tile_b), _round_up(B, SUBLANE)), SUBLANE))
    # Guarantee >= 2 grid steps whenever the batch allows it, so the "parallel"
    # batch axis spans both TensorCores on v7x.
    if B > SUBLANE:
        tile_b = min(tile_b, _round_up(pl.cdiv(B, 2), SUBLANE))

    grid = (pl.cdiv(B, tile_b),)
    out_dtype = jnp.promote_types(x.dtype, w2.dtype)

    # VMEM limit hint: actual (layout-padded) tile footprint with headroom,
    # capped by the generation-aware budget.
    in_l, hid_l, out_l = (_round_up(d, LANE) for d in (in_size, hid, out_size))
    weights_bytes = (in_l * hid_l + hid_l * out_l + 2 * (hid_l + out_l)) * dtype_bytes * 2
    act_bytes = tile_b * (in_l + out_l) * dtype_bytes * 2 + tile_b * hid_l * 4
    vmem_limit = int(min(budget, max(2 * (weights_bytes + act_bytes),
                                     16 * 1024 * 1024)))

    flops = 2 * B * in_size * hid + 2 * B * hid * out_size
    bytes_accessed = dtype_bytes * (B * in_size + in_size * hid + hid
                                    + hid * out_size + out_size + B * out_size)

    # TODO(synk): when accuracy permits, cast x / weights to bfloat16 (keeping
    # preferred_element_type=f32 on the dots) for the bf16-native MXUs on
    # v6e/v7x; kept f32 here to match the PyTorch module's numerics.
    return pl.pallas_call(
        encoder_kernel,
        out_shape=jax.ShapeDtypeStruct((B, out_size), out_dtype),
        grid=grid,
        in_specs=[
            # Streamed activation tile: real (narrow) feature dim, no HBM padding.
            pl.BlockSpec((tile_b, in_size), lambda i: (i, 0)),
            # Weights / biases: constant index_map -> VMEM resident.
            pl.BlockSpec((in_size, hid), lambda i: (0, 0)),
            pl.BlockSpec((1, hid), lambda i: (0, 0)),
            pl.BlockSpec((hid, out_size), lambda i: (0, 0)),
            pl.BlockSpec((1, out_size), lambda i: (0, 0)),
        ],
        # Partial last batch block is masked on store; no cross-row reduction,
        # so garbage edge rows cannot contaminate real rows.
        out_specs=pl.BlockSpec((tile_b, out_size), lambda i: (i, 0)),
        compiler_params=pltpu.CompilerParams(
            dimension_semantics=("parallel",),   # shard batch tiles across TCs
            vmem_limit_bytes=vmem_limit,
        ),
        cost_estimate=pl.CostEstimate(flops=flops, transcendentals=0,
                                      bytes_accessed=bytes_accessed),
    )(x, w1, b1, w2, b2)


def reference_forward(x, w1, b1, w2, b2):
    h = jnp.maximum(
        jnp.dot(x, w1, precision=jax.lax.Precision.HIGHEST) + b1.reshape(1, -1), 0.0)
    return jnp.dot(h, w2, precision=jax.lax.Precision.HIGHEST) + b2.reshape(1, -1)


if __name__ == "__main__":
    # Shapes consistent with Encoder(input_size, hidden_size, output_size)
    input_size, hidden_size, output_size = 16, 32, 8

    key = jax.random.PRNGKey(0)
    kx, k1, k2, k3, k4, kx2 = jax.random.split(key, 6)

    # Torch-style uniform(-1/sqrt(fan_in), 1/sqrt(fan_in)) init.
    bound1 = 1.0 / (input_size ** 0.5)
    bound2 = 1.0 / (hidden_size ** 0.5)
    w1 = jax.random.uniform(k1, (input_size, hidden_size), jnp.float32, -bound1, bound1)
    b1 = jax.random.uniform(k2, (hidden_size,), jnp.float32, -bound1, bound1)
    w2 = jax.random.uniform(k3, (hidden_size, output_size), jnp.float32, -bound2, bound2)
    b2 = jax.random.uniform(k4, (output_size,), jnp.float32, -bound2, bound2)

    # 1) Small correctness config (single batch tile).
    x_small = jax.random.normal(kx, (8, input_size), dtype=jnp.float32)
    out_small = jax.block_until_ready(encoder_forward(x_small, w1, b1, w2, b2))
    ref_small = reference_forward(x_small, w1, b1, w2, b2)
    assert out_small.shape == (8, output_size)
    assert jnp.allclose(out_small, ref_small, atol=1e-5, rtol=1e-5), "mismatch (small)"

    # 2) Ragged batch exercising the batch grid (multi-tile + masked last block).
    x_big = jax.random.normal(kx2, (200, input_size), dtype=jnp.float32)
    out_big = jax.block_until_ready(encoder_forward(x_big, w1, b1, w2, b2, tile_b=64))
    ref_big = reference_forward(x_big, w1, b1, w2, b2)
    assert out_big.shape == (200, output_size)
    assert jnp.allclose(out_big, ref_big, atol=1e-5, rtol=1e-5), "mismatch (batched)"

    print("KERNEL_OK")
</pallas_src>

<mosaic_0001>
module attributes {stable_mosaic.version = 11 : i64} {
  func.func @encoder_kernel(%arg0: i32, %arg1: memref<8x16xf32, #tpu.memory_space<vmem>>, %arg2: memref<16x32xf32, #tpu.memory_space<vmem>>, %arg3: memref<1x32xf32, #tpu.memory_space<vmem>>, %arg4: memref<32x8xf32, #tpu.memory_space<vmem>>, %arg5: memref<1x8xf32, #tpu.memory_space<vmem>>, %arg6: memref<8x8xf32, #tpu.memory_space<vmem>>) attributes {dimension_semantics = [#tpu.dimension_semantics<parallel>], iteration_bounds = array<i64: 1>, scalar_prefetch = 0 : i64, scratch_operands = 0 : i64, tpu.core_type = #tpu.core_type<tc>, window_params = [{transform_indices = @transform_0, window_bounds = array<i64: 8, 16>}, {pipeline_mode = #tpu.pipeline_mode<synchronous>, transform_indices = @transform_1, window_bounds = array<i64: 16, 32>}, {pipeline_mode = #tpu.pipeline_mode<synchronous>, transform_indices = @transform_2, window_bounds = array<i64: 1, 32>}, {pipeline_mode = #tpu.pipeline_mode<synchronous>, transform_indices = @transform_3, window_bounds = array<i64: 32, 8>}, {pipeline_mode = #tpu.pipeline_mode<synchronous>, transform_indices = @transform_4, window_bounds = array<i64: 1, 8>}, {transform_indices = @transform_5, window_bounds = array<i64: 8, 8>}]} {
    %c0 = arith.constant 0 : index
    %c0_0 = arith.constant 0 : index
    %0 = vector.load %arg1[%c0, %c0_0] : memref<8x16xf32, #tpu.memory_space<vmem>>, vector<8x16xf32>
    %c0_1 = arith.constant 0 : index
    %c0_2 = arith.constant 0 : index
    %1 = vector.load %arg2[%c0_1, %c0_2] : memref<16x32xf32, #tpu.memory_space<vmem>>, vector<16x32xf32>
    %cst = arith.constant dense<0.000000e+00> : vector<8x32xf32>
    %2 = tpu.matmul %0, %1, %cst {dimension_numbers = #tpu.dot_dimension_numbers<[1], [0], [0], [1], [0, 0, 1, 1], [], []>} : vector<8x16xf32>, vector<16x32xf32>, vector<8x32xf32> -> vector<8x32xf32>
    %c0_3 = arith.constant 0 : index
    %c0_4 = arith.constant 0 : index
    %3 = vector.load %arg3[%c0_3, %c0_4] : memref<1x32xf32, #tpu.memory_space<vmem>>, vector<1x32xf32>
    %4 = vector.broadcast %3 : vector<1x32xf32> to vector<8x32xf32>
    %5 = arith.addf %2, %4 : vector<8x32xf32>
    %cst_5 = arith.constant 0.000000e+00 : f32
    %6 = vector.broadcast %cst_5 : f32 to vector<8x32xf32>
    %7 = arith.maximumf %5, %6 : vector<8x32xf32>
    %c0_6 = arith.constant 0 : index
    %c0_7 = arith.constant 0 : index
    %8 = vector.load %arg4[%c0_6, %c0_7] : memref<32x8xf32, #tpu.memory_space<vmem>>, vector<32x8xf32>
    %cst_8 = arith.constant dense<0.000000e+00> : vector<8x8xf32>
    %9 = tpu.matmul %7, %8, %cst_8 {dimension_numbers = #tpu.dot_dimension_numbers<[1], [0], [0], [1], [0, 0, 1, 1], [], []>} : vector<8x32xf32>, vector<32x8xf32>, vector<8x8xf32> -> vector<8x8xf32>
    %c0_9 = arith.constant 0 : index
    %c0_10 = arith.constant 0 : index
    %10 = vector.load %arg5[%c0_9, %c0_10] : memref<1x8xf32, #tpu.memory_space<vmem>>, vector<1x8xf32>
    %11 = vector.broadcast %10 : vector<1x8xf32> to vector<8x8xf32>
    %12 = arith.addf %9, %11 : vector<8x8xf32>
    %c0_11 = arith.constant 0 : index
    %c0_12 = arith.constant 0 : index
    %13 = vector.load %arg6[%c0_11, %c0_12] : memref<8x8xf32, #tpu.memory_space<vmem>>, vector<8x8xf32>
    tpu.vector_store %arg6[%c0_11, %c0_12], %12 {strides = array<i32>} : memref<8x8xf32, #tpu.memory_space<vmem>>, vector<8x8xf32>,
    return
  }
  func.func @transform_0(%arg0: i32) -> (i32, i32) {
    %c0_i32 = arith.constant 0 : i32
    %c0_i32_0 = arith.constant 0 : i32
    return %arg0, %c0_i32 : i32, i32
  }
  func.func @transform_1(%arg0: i32) -> (i32, i32) {
    %c0_i32 = arith.constant 0 : i32
    %c0_i32_0 = arith.constant 0 : i32
    %c0_i32_1 = arith.constant 0 : i32
    return %c0_i32, %c0_i32_0 : i32, i32
  }
  func.func @transform_2(%arg0: i32) -> (i32, i32) {
    %c0_i32 = arith.constant 0 : i32
    %c0_i32_0 = arith.constant 0 : i32
    %c0_i32_1 = arith.constant 0 : i32
    return %c0_i32, %c0_i32_0 : i32, i32
  }
  func.func @transform_3(%arg0: i32) -> (i32, i32) {
    %c0_i32 = arith.constant 0 : i32
    %c0_i32_0 = arith.constant 0 : i32
    %c0_i32_1 = arith.constant 0 : i32
    return %c0_i32, %c0_i32_0 : i32, i32
  }
  func.func @transform_4(%arg0: i32) -> (i32, i32) {
    %c0_i32 = arith.constant 0 : i32
    %c0_i32_0 = arith.constant 0 : i32
    %c0_i32_1 = arith.constant 0 : i32
    return %c0_i32, %c0_i32_0 : i32, i32
  }
  func.func @transform_5(%arg0: i32) -> (i32, i32) {
    %c0_i32 = arith.constant 0 : i32
    %c0_i32_0 = arith.constant 0 : i32
    return %arg0, %c0_i32 : i32, i32
  }
}

</mosaic_0001>

<llo_original>
// kernel: encoder_forward.1
$region0: #{encoder_forward.1}
  #allocation0 [shape = 'u32[]', space=smem, size = 0x4, offset = 0x4, fixed_abs, tag = 'smem constant byte address 0x4 - core index']
  #allocation1 [shape = 'u32[144,128]{1,0:T(1,128)}', space=vmem, size = 0x12000, scoped, tag = 'internal scratch']
  %s0 = inlined_call_operand.vmem [shape: f32[8,16], index: 0, kind: input, shape index: {}]
  %s1 = inlined_call_operand.vmem [shape: f32[16,32], index: 1, kind: input, shape index: {}]
  %s2 = inlined_call_operand.vmem [shape: f32[1,32], index: 2, kind: input, shape index: {}]
  %s3 = inlined_call_operand.vmem [shape: f32[32,8], index: 3, kind: input, shape index: {}]
  %s4 = inlined_call_operand.vmem [shape: f32[1,8], index: 4, kind: input, shape index: {}]
  %s5 = inlined_call_operand.hbm [shape: f32[8,8], index: 5, kind: output, shape index: {}]
  %s6 = sld [smem:[#allocation0]]
  $region30: #{encoder_forward.1} parent=0
    _
  %s8 = ssub.s32 1, %s6
  %s9 = scalar_select 0, %s8, %s6
  $region1: #{encoder_forward.1} parent=0
    #allocation2 [shape = 'u8[4096]{0}', space=vmem, size = 0x1000, scoped, tag = 'output window, operand 0, single buffered']
    #allocation3 [shape = 's32[1]{0}', space=sflag, size = 0x4, scoped, tag = 'scoped memory for encoder_forward.1']
    %10 = vsyncpa [#allocation3], 0
    // Predicated region
    $region2: #{encoder_forward.1} parent=1 // pred_check
      _
    $region3: #{encoder_forward.1} parent=1 // pred_check_branch
      %12 = sbr.rel (0) target = $region5
    $region4: #{encoder_forward.1} parent=1 // pred_region
      _
    $region5: #{encoder_forward.1} parent=1 // pred_fallthru
      _
    // Predicated region
    $region6: #{encoder_forward.1} parent=1 // pred_check
      _
    $region7: #{encoder_forward.1} parent=1 // pred_check_branch
      %14 = sbr.rel (0) target = $region9
    $region8: #{encoder_forward.1} parent=1 // pred_region
      _
    $region9: #{encoder_forward.1} parent=1 // pred_fallthru
      _
    // Predicated region
    $region10: #{encoder_forward.1} parent=1 // pred_check
      _
    $region11: #{encoder_forward.1} parent=1 // pred_check_branch
      %16 = sbr.rel (0) target = $region13
    $region12: #{encoder_forward.1} parent=1 // pred_region
      _
    $region13: #{encoder_forward.1} parent=1 // pred_fallthru
      _
    // Predicated region
    $region14: #{encoder_forward.1} parent=1 // pred_check
      _
    $region15: #{encoder_forward.1} parent=1 // pred_check_branch
      %18 = sbr.rel (0) target = $region17
    $region16: #{encoder_forward.1} parent=1 // pred_region
      _
    $region17: #{encoder_forward.1} parent=1 // pred_fallthru
      _
    // Predicated region
    $region18: #{encoder_forward.1} parent=1 // pred_check
      _
    $region19: #{encoder_forward.1} parent=1 // pred_check_branch
      %20 = sbr.rel (0) target = $region21
    $region20: #{encoder_forward.1} parent=1 // pred_region
      _
    $region21: #{encoder_forward.1} parent=1 // pred_fallthru
      _
    %v21 = vld [vmem:[%s0] sm:$0xff]
    %v22 = vld [vmem:[%s1] sm:$0xff]
    %v23 = vld [vmem:[%s1 + $0x8] sm:$0xff]
    %v24 = vld [vmem:[%s2] sm:$0x1]
    %v26 = vlaneseq
    %v27 = vshrl.u32 %v26, 7
    %v28 = vsub.s32 0, %v27
    %v29 = vrot.slane %v24, %v28
    %vm31 = vcmask 130048
    %v33 = vsel %vm31, %v21, 0
    %35 = vmatprep.subr.mxu0 0.0
    %36 = vmatpush1.msra.mxu0 0.0
    %37 = vmatprep.subr.mxu0 0.0
    %38 = vmatpush1.msra.mxu0 0.0
    %39 = vmatprep.subr.mxu0 0.0
    %40 = vmatpush1.msra.mxu0 0.0
    %41 = vmatprep.subr.mxu0 0.0
    %42 = vmatpush1.msra.mxu0 0.0
    %43 = vmatprep.subr.mxu0 0.0
    %44 = vmatpush1.msra.mxu0 0.0
    %45 = vmatprep.subr.mxu0 0.0
    %46 = vmatpush1.msra.mxu0 0.0
    %47 = vmatprep.subr.mxu0 0.0
    %48 = vmatpush1.msra.mxu0 0.0
    %49 = vmatprep.subr.mxu0 0.0
    %50 = vmatpush1.msra.mxu0 0.0
    %51 = vmatprep.subr.mxu0 0.0
    %52 = vmatpush1.msra.mxu0 0.0
    %53 = vmatprep.subr.mxu0 0.0
    %54 = vmatpush1.msra.mxu0 0.0
    %55 = vmatprep.subr.mxu0 0.0
    %56 = vmatpush1.msra.mxu0 0.0
    %57 = vmatprep.subr.mxu0 0.0
    %58 = vmatpush1.msra.mxu0 0.0
    %59 = vmatprep.subr.mxu0 0.0
    %60 = vmatpush1.msra.mxu0 0.0
    %61 = vmatprep.subr.mxu0 0.0
    %62 = vmatpush1.msra.mxu0 0.0
    %63 = vmatprep.subr.mxu0 0.0
    %64 = vmatpush1.msra.mxu0 %v23
    %65 = vmatprep.subr.mxu0 0.0
    %66 = vmatpush1.msra.mxu0 %v22
    %67 = vmatprep.subr.mxu0 0.0
    %68 = vmatpush2.msra.mxu0 0.0
    %69 = vmatprep.subr.mxu0 0.0
    %70 = vmatpush2.msra.mxu0 0.0
    %71 = vmatprep.subr.mxu0 0.0
    %72 = vmatpush2.msra.mxu0 0.0
    %73 = vmatprep.subr.mxu0 0.0
    %74 = vmatpush2.msra.mxu0 0.0
    %75 = vmatprep.subr.mxu0 0.0
    %76 = vmatpush2.msra.mxu0 0.0
    %77 = vmatprep.subr.mxu0 0.0
    %78 = vmatpush2.msra.mxu0 0.0
    %79 = vmatprep.subr.mxu0 0.0
    %80 = vmatpush2.msra.mxu0 0.0
    %81 = vmatprep.subr.mxu0 0.0
    %82 = vmatpush2.msra.mxu0 0.0
    %83 = vmatprep.subr.mxu0 0.0
    %84 = vmatpush2.msra.mxu0 0.0
    %85 = vmatprep.subr.mxu0 0.0
    %86 = vmatpush2.msra.mxu0 0.0
    %87 = vmatprep.subr.mxu0 0.0
    %88 = vmatpush2.msra.mxu0 0.0
    %89 = vmatprep.subr.mxu0 0.0
    %90 = vmatpush2.msra.mxu0 0.0
    %91 = vmatprep.subr.mxu0 0.0
    %92 = vmatpush2.msra.mxu0 0.0
    %93 = vmatprep.subr.mxu0 0.0
    %94 = vmatpush2.msra.mxu0 0.0
    %95 = vmatprep.subr.mxu0 0.0
    %96 = vmatpush2.msra.mxu0 0.0
    %97 = vmatprep.subr.mxu0 0.0
    %98 = vmatpush2.msra.mxu0 0.0
    %99 = vmatprep.mubr.f32.mxu0 0.0
    %100 = vmatmul.mubr.f32.gmra.mxu0 %v33
    %v101 = vpop.f32.mrf.mxu0
    %v102 = vadd.f32 %v29, %v101
    %v103 = vpop.f32.mrf.mxu0
    %104 = vdwg.mxu0
    %v105 = vmax.f32 %v102, 0.0
    %v106 = vld [vmem:[%s3] sm:$0xff]
    %v107 = vld [vmem:[%s3 + $0x8] sm:$0xff]
    %v108 = vld [vmem:[%s3 + $0x10] sm:$0xff]
    %v109 = vld [vmem:[%s3 + $0x18] sm:$0xff]
    %v110 = vld [vmem:[%s4] sm:$0x1]
    %v112 = vlaneseq
    %v113 = vshrl.u32 %v112, 7
    %v114 = vsub.s32 0, %v113
    %v115 = vrot.slane %v110, %v114
    %vm117 = vcmask 261120
    %v119 = vsel %vm117, %v105, 0
    %121 = vmatprep.subr.mxu0 0.0
    %122 = vmatpush1.msra.mxu0 0.0
    %123 = vmatprep.subr.mxu0 0.0
    %124 = vmatpush1.msra.mxu0 0.0
    %125 = vmatprep.subr.mxu0 0.0
    %126 = vmatpush1.msra.mxu0 0.0
    %127 = vmatprep.subr.mxu0 0.0
    %128 = vmatpush1.msra.mxu0 0.0
    %129 = vmatprep.subr.mxu0 0.0
    %130 = vmatpush1.msra.mxu0 0.0
    %131 = vmatprep.subr.mxu0 0.0
    %132 = vmatpush1.msra.mxu0 0.0
    %133 = vmatprep.subr.mxu0 0.0
    %134 = vmatpush1.msra.mxu0 0.0
    %135 = vmatprep.subr.mxu0 0.0
    %136 = vmatpush1.msra.mxu0 0.0
    %137 = vmatprep.subr.mxu0 0.0
    %138 = vmatpush1.msra.mxu0 0.0
    %139 = vmatprep.subr.mxu0 0.0
    %140 = vmatpush1.msra.mxu0 0.0
    %141 = vmatprep.subr.mxu0 0.0
    %142 = vmatpush1.msra.mxu0 0.0
    %143 = vmatprep.subr.mxu0 0.0
    %144 = vmatpush1.msra.mxu0 0.0
    %145 = vmatprep.subr.mxu0 0.0
    %146 = vmatpush1.msra.mxu0 %v109
    %147 = vmatprep.subr.mxu0 0.0
    %148 = vmatpush1.msra.mxu0 %v108
    %149 = vmatprep.subr.mxu0 0.0
    %150 = vmatpush1.msra.mxu0 %v107
    %151 = vmatprep.subr.mxu0 0.0
    %152 = vmatpush1.msra.mxu0 %v106
    %153 = vmatprep.subr.mxu0 0.0
    %154 = vmatpush2.msra.mxu0 0.0
    %155 = vmatprep.subr.mxu0 0.0
    %156 = vmatpush2.msra.mxu0 0.0
    %157 = vmatprep.subr.mxu0 0.0
    %158 = vmatpush2.msra.mxu0 0.0
    %159 = vmatprep.subr.mxu0 0.0
    %160 = vmatpush2.msra.mxu0 0.0
    %161 = vmatprep.subr.mxu0 0.0
    %162 = vmatpush2.msra.mxu0 0.0
    %163 = vmatprep.subr.mxu0 0.0
    %164 = vmatpush2.msra.mxu0 0.0
    %165 = vmatprep.subr.mxu0 0.0
    %166 = vmatpush2.msra.mxu0 0.0
    %167 = vmatprep.subr.mxu0 0.0
    %168 = vmatpush2.msra.mxu0 0.0
    %169 = vmatprep.subr.mxu0 0.0
    %170 = vmatpush2.msra.mxu0 0.0
    %171 = vmatprep.subr.mxu0 0.0
    %172 = vmatpush2.msra.mxu0 0.0
    %173 = vmatprep.subr.mxu0 0.0
    %174 = vmatpush2.msra.mxu0 0.0
    %175 = vmatprep.subr.mxu0 0.0
    %176 = vmatpush2.msra.mxu0 0.0
    %177 = vmatprep.subr.mxu0 0.0
    %178 = vmatpush2.msra.mxu0 0.0
    %179 = vmatprep.subr.mxu0 0.0
    %180 = vmatpush2.msra.mxu0 0.0
    %181 = vmatprep.subr.mxu0 0.0
    %182 = vmatpush2.msra.mxu0 0.0
    %183 = vmatprep.subr.mxu0 0.0
    %184 = vmatpush2.msra.mxu0 0.0
    %185 = vmatprep.mubr.f32.mxu0 0.0
    %186 = vmatmul.mubr.f32.gmra.mxu0 %v119
    %v187 = vpop.f32.mrf.mxu0
    %v188 = vadd.f32 %v115, %v187
    %v189 = vpop.f32.mrf.mxu0
    %190 = vdwg.mxu0
    %vm191 = vcmask 64512
    %192 = vst.msk [vmem:[#allocation2] sm:$0xff] %vm191, %v188
    // Predicated region
    $region22: #{encoder_forward.1} parent=1 // pred_check
      _
    $region23: #{encoder_forward.1} parent=1 // pred_check_branch
      %194 = sbr.rel (0) target = $region25
    $region24: #{encoder_forward.1} parent=1 // pred_region
      %s196 = ssub.s32 128, 128
      %197 = vsyncadd [#allocation3], %s196
      %s199 = sshll.u32 [#allocation2], 4
      %s200 = int_to_ptr.vmem [resolvable:$true] %s199
      %202 = dma.vmem_to_hbm [thread:$0]  %s200, 128, %s5, [#allocation3]
    $region25: #{encoder_forward.1} parent=1 // pred_fallthru
      _
    // Predicated region
    $region26: #{encoder_forward.1} parent=1 // pred_check
      _
    $region27: #{encoder_forward.1} parent=1 // pred_check_branch
      %204 = sbr.rel (0) target = $region29
    $region28: #{encoder_forward.1} parent=1 // pred_region
      %205 = dma.done [#allocation3], 128
    $region29: #{encoder_forward.1} parent=1 // pred_fallthru
      _
    %206 = vsyncpa [#allocation3], 1

</llo_original>
